<compile_context>
chip_gen: v5e
topology: v5e:2x2
jax: 0.10.0
libtpu: 0.0.40
codegen_flags: <defaults>
</compile_context>

<pallas_src>
import jax
import jax.numpy as jnp
from jax.experimental import pallas as pl
from jax.experimental.pallas import tpu as pltpu

_H1 = 128   # first hidden width
_H2 = 64    # second hidden width
_OUT = 4    # output width


def _round_up(x, m):
    return (x + m - 1) // m * m


def _encoder_kernel(x_ref, w1_ref, b1_ref, w2_ref, b2_ref, w3_ref, b3_ref, o_ref):
    # Fused hot path: 3 MXU matmuls (f32 accumulation) + EUP tanh/tanh/sigmoid.
    h1 = jnp.tanh(
        jnp.dot(x_ref[...], w1_ref[...], preferred_element_type=jnp.float32)
        + b1_ref[...]
    )
    h2 = jnp.tanh(
        jnp.dot(h1, w2_ref[...], preferred_element_type=jnp.float32) + b2_ref[...]
    )
    z = jnp.dot(h2, w3_ref[...], preferred_element_type=jnp.float32) + b3_ref[...]
    o_ref[...] = jax.nn.sigmoid(z).astype(o_ref.dtype)


def _vmem_capacity_bytes():
    try:
        return int(pltpu.get_tpu_info().vmem_capacity_bytes)
    except Exception:
        return 64 << 20  # conservative fallback (v7x per-core VMEM)


def _choose_block_m(batch, d, in_bytes, weight_bytes, vmem_capacity):
    """Largest batch tile (multiple of 16, <=4096) fitting the streamed-tile budget."""
    # Generation-aware streamed budget: big VMEM (v5e/v6e, 128 MiB) -> spend
    # ~64 MiB on streamed x/out tiles; small VMEM (v7x, 64 MiB) -> ~24 MiB.
    stream_budget = (64 << 20) if vmem_capacity >= (100 << 20) else (24 << 20)
    cap = int(vmem_capacity * 0.75)
    headroom = 4 << 20
    # Weights are double-buffered by Pallas even with constant index maps.
    stream_budget = min(stream_budget, cap - 2 * weight_bytes - headroom)
    # Bytes per streamed batch row, double-buffered (x tile in, f32 out tile back).
    per_row = 2 * (d * in_bytes + _OUT * 4)
    tm = stream_budget // per_row
    tm = int(max(16, min(tm, 4096)))
    tm = (tm // 16) * 16                      # bf16 sublane packing is (16, 128)
    # Keep >=2 grid steps for batches big enough so both v7x TensorCores get work.
    if batch >= 32:
        tm = min(tm, _round_up((batch + 1) // 2, 16))
    tm = min(tm, _round_up(batch, 16))
    return max(tm, 16)


def encoder_forward(x, params, *, use_bf16_input=False):
    """x: [B, ...] (any trailing shape, flattened). Returns [B, 4] float32."""
    B = x.shape[0]
    x2d = x.reshape(B, -1).astype(jnp.float32)       # nn.Flatten semantics
    D = x2d.shape[1]
    w1, b1, w2, b2, w3, b3 = params                  # [in, out] weights, [1, out] biases

    if use_bf16_input:
        # Halve the dominant x HBM stream; accumulation and activations stay f32.
        x2d = x2d.astype(jnp.bfloat16)
        w1 = w1.astype(jnp.bfloat16)

    in_bytes = x2d.dtype.itemsize
    operands = (w1, b1, w2, b2, w3, b3)
    weight_bytes = sum(int(a.size) * a.dtype.itemsize for a in operands)

    capacity = _vmem_capacity_bytes()
    block_m = _choose_block_m(B, D, in_bytes, weight_bytes, capacity)
    grid = (pl.cdiv(B, block_m),)

    # Scoped VMEM: 2x resident weights (double-buffered) + double-buffered
    # streamed x/out tiles + headroom, capped at 75% of physical VMEM.
    resident = 2 * weight_bytes
    streamed = 2 * block_m * (D * in_bytes + _OUT * 4)
    vmem_limit = min(int(capacity * 0.75),
                     max(32 << 20, resident + streamed + (8 << 20)))

    cost = pl.CostEstimate(
        flops=2 * B * (D * _H1 + _H1 * _H2 + _H2 * _OUT),
        transcendentals=B * (_H1 + _H2 + _OUT),
        bytes_accessed=B * D * in_bytes + weight_bytes + B * _OUT * 4,
    )

    out = pl.pallas_call(
        _encoder_kernel,
        out_shape=jax.ShapeDtypeStruct((B, _OUT), jnp.float32),
        grid=grid,
        in_specs=[
            pl.BlockSpec((block_m, D), lambda i: (i, 0)),   # x: streamed over batch
            pl.BlockSpec((D, _H1), lambda i: (0, 0)),       # w1 (VMEM-resident)
            pl.BlockSpec((1, _H1), lambda i: (0, 0)),       # b1
            pl.BlockSpec((_H1, _H2), lambda i: (0, 0)),     # w2
            pl.BlockSpec((1, _H2), lambda i: (0, 0)),       # b2
            pl.BlockSpec((_H2, _OUT), lambda i: (0, 0)),    # w3
            pl.BlockSpec((1, _OUT), lambda i: (0, 0)),      # b3
        ],
        out_specs=pl.BlockSpec((block_m, _OUT), lambda i: (i, 0)),
        compiler_params=pltpu.CompilerParams(
            dimension_semantics=("parallel",),
            vmem_limit_bytes=int(vmem_limit),
        ),
        cost_estimate=cost,
    )(x2d, w1, b1, w2, b2, w3, b3)

    return out


def init_params(key, input_dim):
    """Deterministic init; weights stored as [in, out] (transpose of PyTorch)."""
    ks = jax.random.split(key, 6)

    def linear(kw, kb, fan_in, fan_out):
        bound = 1.0 / jnp.sqrt(fan_in)  # torch.nn.Linear default scheme
        w = jax.random.uniform(kw, (fan_in, fan_out), jnp.float32, -bound, bound)
        b = jax.random.uniform(kb, (1, fan_out), jnp.float32, -bound, bound)
        return w, b

    w1, b1 = linear(ks[0], ks[1], input_dim, _H1)
    w2, b2 = linear(ks[2], ks[3], _H1, _H2)
    w3, b3 = linear(ks[4], ks[5], _H2, _OUT)
    return (w1, b1, w2, b2, w3, b3)


def _reference(x, params):
    B = x.shape[0]
    x2d = x.reshape(B, -1).astype(jnp.float32)
    w1, b1, w2, b2, w3, b3 = params
    h1 = jnp.tanh(x2d @ w1 + b1)
    h2 = jnp.tanh(h1 @ w2 + b2)
    return jax.nn.sigmoid(h2 @ w3 + b3)


if __name__ == "__main__":
    key = jax.random.PRNGKey(0)
    k_x, k_p = jax.random.split(key)

    # Small NCHW example: B=10 exercises the partial batch tile (no padding
    # pass needed), flattened D = 3*8*8 = 192 exercises a non-128-multiple K.
    B, C, H, W = 10, 3, 8, 8
    x = jax.random.normal(k_x, (B, C, H, W), dtype=jnp.float32)
    params = init_params(k_p, input_dim=C * H * W)

    ref = _reference(x, params)

    out = jax.block_until_ready(encoder_forward(x, params))
    assert out.shape == (B, 4), out.shape
    assert jnp.allclose(out, ref, atol=1e-5, rtol=1e-5)

    # Optional bandwidth-saving path: bf16 x / w1 stream, f32 accumulation.
    out_bf16 = jax.block_until_ready(encoder_forward(x, params, use_bf16_input=True))
    assert out_bf16.shape == (B, 4)
    assert jnp.allclose(out_bf16, ref, atol=3e-2, rtol=3e-2)

    print("KERNEL_OK")
</pallas_src>

<mosaic_0001>
module attributes {stable_mosaic.version = 11 : i64} {
  func.func @_encoder_kernel(%arg0: i32, %arg1: memref<16x192xf32, #tpu.memory_space<vmem>>, %arg2: memref<192x128xf32, #tpu.memory_space<vmem>>, %arg3: memref<1x128xf32, #tpu.memory_space<vmem>>, %arg4: memref<128x64xf32, #tpu.memory_space<vmem>>, %arg5: memref<1x64xf32, #tpu.memory_space<vmem>>, %arg6: memref<64x4xf32, #tpu.memory_space<vmem>>, %arg7: memref<1x4xf32, #tpu.memory_space<vmem>>, %arg8: memref<16x4xf32, #tpu.memory_space<vmem>>) attributes {dimension_semantics = [#tpu.dimension_semantics<parallel>], iteration_bounds = array<i64: 1>, scalar_prefetch = 0 : i64, scratch_operands = 0 : i64, tpu.core_type = #tpu.core_type<tc>, window_params = [{transform_indices = @transform_0, window_bounds = array<i64: 16, 192>}, {pipeline_mode = #tpu.pipeline_mode<synchronous>, transform_indices = @transform_1, window_bounds = array<i64: 192, 128>}, {pipeline_mode = #tpu.pipeline_mode<synchronous>, transform_indices = @transform_2, window_bounds = array<i64: 1, 128>}, {pipeline_mode = #tpu.pipeline_mode<synchronous>, transform_indices = @transform_3, window_bounds = array<i64: 128, 64>}, {pipeline_mode = #tpu.pipeline_mode<synchronous>, transform_indices = @transform_4, window_bounds = array<i64: 1, 64>}, {pipeline_mode = #tpu.pipeline_mode<synchronous>, transform_indices = @transform_5, window_bounds = array<i64: 64, 4>}, {pipeline_mode = #tpu.pipeline_mode<synchronous>, transform_indices = @transform_6, window_bounds = array<i64: 1, 4>}, {transform_indices = @transform_7, window_bounds = array<i64: 16, 4>}]} {
    %c0 = arith.constant 0 : index
    %c0_0 = arith.constant 0 : index
    %0 = vector.load %arg1[%c0, %c0_0] : memref<16x192xf32, #tpu.memory_space<vmem>>, vector<16x192xf32>
    %c0_1 = arith.constant 0 : index
    %c0_2 = arith.constant 0 : index
    %1 = vector.load %arg2[%c0_1, %c0_2] : memref<192x128xf32, #tpu.memory_space<vmem>>, vector<192x128xf32>
    %cst = arith.constant dense<0.000000e+00> : vector<16x128xf32>
    %2 = tpu.matmul %0, %1, %cst {dimension_numbers = #tpu.dot_dimension_numbers<[1], [0], [0], [1], [0, 0, 1, 1], [], []>} : vector<16x192xf32>, vector<192x128xf32>, vector<16x128xf32> -> vector<16x128xf32>
    %c0_3 = arith.constant 0 : index
    %c0_4 = arith.constant 0 : index
    %3 = vector.load %arg3[%c0_3, %c0_4] : memref<1x128xf32, #tpu.memory_space<vmem>>, vector<1x128xf32>
    %4 = vector.broadcast %3 : vector<1x128xf32> to vector<16x128xf32>
    %5 = arith.addf %2, %4 : vector<16x128xf32>
    %6 = math.tanh %5 : vector<16x128xf32>
    %c0_5 = arith.constant 0 : index
    %c0_6 = arith.constant 0 : index
    %7 = vector.load %arg4[%c0_5, %c0_6] : memref<128x64xf32, #tpu.memory_space<vmem>>, vector<128x64xf32>
    %cst_7 = arith.constant dense<0.000000e+00> : vector<16x64xf32>
    %8 = tpu.matmul %6, %7, %cst_7 {dimension_numbers = #tpu.dot_dimension_numbers<[1], [0], [0], [1], [0, 0, 1, 1], [], []>} : vector<16x128xf32>, vector<128x64xf32>, vector<16x64xf32> -> vector<16x64xf32>
    %c0_8 = arith.constant 0 : index
    %c0_9 = arith.constant 0 : index
    %9 = vector.load %arg5[%c0_8, %c0_9] : memref<1x64xf32, #tpu.memory_space<vmem>>, vector<1x64xf32>
    %10 = vector.broadcast %9 : vector<1x64xf32> to vector<16x64xf32>
    %11 = arith.addf %8, %10 : vector<16x64xf32>
    %12 = math.tanh %11 : vector<16x64xf32>
    %c0_10 = arith.constant 0 : index
    %c0_11 = arith.constant 0 : index
    %13 = vector.load %arg6[%c0_10, %c0_11] : memref<64x4xf32, #tpu.memory_space<vmem>>, vector<64x4xf32>
    %cst_12 = arith.constant dense<0.000000e+00> : vector<16x4xf32>
    %14 = tpu.matmul %12, %13, %cst_12 {dimension_numbers = #tpu.dot_dimension_numbers<[1], [0], [0], [1], [0, 0, 1, 1], [], []>} : vector<16x64xf32>, vector<64x4xf32>, vector<16x4xf32> -> vector<16x4xf32>
    %c0_13 = arith.constant 0 : index
    %c0_14 = arith.constant 0 : index
    %15 = vector.load %arg7[%c0_13, %c0_14] : memref<1x4xf32, #tpu.memory_space<vmem>>, vector<1x4xf32>
    %16 = vector.broadcast %15 : vector<1x4xf32> to vector<16x4xf32>
    %17 = arith.addf %14, %16 : vector<16x4xf32>
    %18 = arith.negf %17 : vector<16x4xf32>
    %19 = math.exp %18 : vector<16x4xf32>
    %cst_15 = arith.constant 1.000000e+00 : f32
    %20 = vector.broadcast %cst_15 : f32 to vector<16x4xf32>
    %21 = arith.addf %20, %19 : vector<16x4xf32>
    %22 = arith.divf %20, %21 : vector<16x4xf32>
    %c0_16 = arith.constant 0 : index
    %c0_17 = arith.constant 0 : index
    %23 = vector.load %arg8[%c0_16, %c0_17] : memref<16x4xf32, #tpu.memory_space<vmem>>, vector<16x4xf32>
    tpu.vector_store %arg8[%c0_16, %c0_17], %22 {strides = array<i32>} : memref<16x4xf32, #tpu.memory_space<vmem>>, vector<16x4xf32>,
    return
  }
  func.func @transform_0(%arg0: i32) -> (i32, i32) {
    %c0_i32 = arith.constant 0 : i32
    %c0_i32_0 = arith.constant 0 : i32
    return %arg0, %c0_i32 : i32, i32
  }
  func.func @transform_1(%arg0: i32) -> (i32, i32) {
    %c0_i32 = arith.constant 0 : i32
    %c0_i32_0 = arith.constant 0 : i32
    %c0_i32_1 = arith.constant 0 : i32
    return %c0_i32, %c0_i32_0 : i32, i32
  }
  func.func @transform_2(%arg0: i32) -> (i32, i32) {
    %c0_i32 = arith.constant 0 : i32
    %c0_i32_0 = arith.constant 0 : i32
    %c0_i32_1 = arith.constant 0 : i32
    return %c0_i32, %c0_i32_0 : i32, i32
  }
  func.func @transform_3(%arg0: i32) -> (i32, i32) {
    %c0_i32 = arith.constant 0 : i32
    %c0_i32_0 = arith.constant 0 : i32
    %c0_i32_1 = arith.constant 0 : i32
    return %c0_i32, %c0_i32_0 : i32, i32
  }
  func.func @transform_4(%arg0: i32) -> (i32, i32) {
    %c0_i32 = arith.constant 0 : i32
    %c0_i32_0 = arith.constant 0 : i32
    %c0_i32_1 = arith.constant 0 : i32
    return %c0_i32, %c0_i32_0 : i32, i32
  }
  func.func @transform_5(%arg0: i32) -> (i32, i32) {
    %c0_i32 = arith.constant 0 : i32
    %c0_i32_0 = arith.constant 0 : i32
    %c0_i32_1 = arith.constant 0 : i32
    return %c0_i32, %c0_i32_0 : i32, i32
  }
  func.func @transform_6(%arg0: i32) -> (i32, i32) {
    %c0_i32 = arith.constant 0 : i32
    %c0_i32_0 = arith.constant 0 : i32
    %c0_i32_1 = arith.constant 0 : i32
    return %c0_i32, %c0_i32_0 : i32, i32
  }
  func.func @transform_7(%arg0: i32) -> (i32, i32) {
    %c0_i32 = arith.constant 0 : i32
    %c0_i32_0 = arith.constant 0 : i32
    return %arg0, %c0_i32 : i32, i32
  }
}

</mosaic_0001>

<llo_original>
// kernel: tpu_custom_call.1
$region0: #{tpu_custom_call.1}
  #allocation0 [shape = 'u32[]', space=smem, size = 0x4, offset = 0x4, fixed_abs, tag = 'smem constant byte address 0x4 - core index']
  #allocation1 [shape = 'u32[72,128]{1,0:T(1,128)}', space=vmem, size = 0x9000, scoped, tag = 'internal scratch']
  %s0 = inlined_call_operand.hbm [shape: f32[10,192], index: 0, kind: input, shape index: {}]
  %s1 = inlined_call_operand.vmem [shape: f32[192,128], index: 1, kind: input, shape index: {}]
  %s2 = inlined_call_operand.vmem [shape: f32[1,128], index: 2, kind: input, shape index: {}]
  %s3 = inlined_call_operand.vmem [shape: f32[128,64], index: 3, kind: input, shape index: {}]
  %s4 = inlined_call_operand.vmem [shape: f32[1,64], index: 4, kind: input, shape index: {}]
  %s5 = inlined_call_operand.vmem [shape: f32[64,4], index: 5, kind: input, shape index: {}]
  %s6 = inlined_call_operand.vmem [shape: f32[1,4], index: 6, kind: input, shape index: {}]
  %s7 = inlined_call_operand.vmem [shape: f32[10,4], index: 7, kind: output, shape index: {}]
  %s8 = sld [smem:[#allocation0]]
  $region42: #{tpu_custom_call.1} parent=0
    _
  %s10 = ssub.s32 1, %s8
  %s11 = scalar_select 0, %s10, %s8
  $region1: #{tpu_custom_call.1} parent=0
    #allocation2 [shape = 'u8[16384]{0}', space=vmem, size = 0x4000, scoped, tag = 'input window, operand 0, single buffered']
    #allocation3 [shape = 's32[1]{0}', space=sflag, size = 0x4, scoped, tag = 'scoped memory for tpu_custom_call.1']
    %12 = vsyncpa [#allocation3], 0
    // Predicated region
    $region2: #{tpu_custom_call.1} parent=1 // pred_check
      _
    $region3: #{tpu_custom_call.1} parent=1 // pred_check_branch
      %14 = sbr.rel (0) target = $region5
    $region4: #{tpu_custom_call.1} parent=1 // pred_region
      %16 = vsyncadd [#allocation3], 0
      %s17 = sshll.u32 %s0, 4
      %s18 = int_to_ptr.hbm [resolvable:$true] %s17
      %s19 = sshll.u32 [#allocation2], 4
      %s20 = int_to_ptr.vmem [resolvable:$true] %s19
      %25 = dma.hbm_to_vmem [thread:$0]  %s18, 512, %s20, [#allocation3], 256, 256, 16
    $region5: #{tpu_custom_call.1} parent=1 // pred_fallthru
      _
    // Predicated region
    $region6: #{tpu_custom_call.1} parent=1 // pred_check
      _
    $region7: #{tpu_custom_call.1} parent=1 // pred_check_branch
      %27 = sbr.rel (0) target = $region9
    $region8: #{tpu_custom_call.1} parent=1 // pred_region
      _
    $region9: #{tpu_custom_call.1} parent=1 // pred_fallthru
      _
    // Predicated region
    $region10: #{tpu_custom_call.1} parent=1 // pred_check
      _
    $region11: #{tpu_custom_call.1} parent=1 // pred_check_branch
      %29 = sbr.rel (0) target = $region13
    $region12: #{tpu_custom_call.1} parent=1 // pred_region
      _
    $region13: #{tpu_custom_call.1} parent=1 // pred_fallthru
      _
    // Predicated region
    $region14: #{tpu_custom_call.1} parent=1 // pred_check
      _
    $region15: #{tpu_custom_call.1} parent=1 // pred_check_branch
      %31 = sbr.rel (0) target = $region17
    $region16: #{tpu_custom_call.1} parent=1 // pred_region
      _
    $region17: #{tpu_custom_call.1} parent=1 // pred_fallthru
      _
    // Predicated region
    $region18: #{tpu_custom_call.1} parent=1 // pred_check
      _
    $region19: #{tpu_custom_call.1} parent=1 // pred_check_branch
      %33 = sbr.rel (0) target = $region21
    $region20: #{tpu_custom_call.1} parent=1 // pred_region
      _
    $region21: #{tpu_custom_call.1} parent=1 // pred_fallthru
      _
    // Predicated region
    $region22: #{tpu_custom_call.1} parent=1 // pred_check
      _
    $region23: #{tpu_custom_call.1} parent=1 // pred_check_branch
      %35 = sbr.rel (0) target = $region25
    $region24: #{tpu_custom_call.1} parent=1 // pred_region
      _
    $region25: #{tpu_custom_call.1} parent=1 // pred_fallthru
      _
    // Predicated region
    $region26: #{tpu_custom_call.1} parent=1 // pred_check
      _
    $region27: #{tpu_custom_call.1} parent=1 // pred_check_branch
      %37 = sbr.rel (0) target = $region29
    $region28: #{tpu_custom_call.1} parent=1 // pred_region
      _
    $region29: #{tpu_custom_call.1} parent=1 // pred_fallthru
      _
    // Predicated region
    $region30: #{tpu_custom_call.1} parent=1 // pred_check
      _
    $region31: #{tpu_custom_call.1} parent=1 // pred_check_branch
      %39 = sbr.rel (0) target = $region33
    $region32: #{tpu_custom_call.1} parent=1 // pred_region
      %41 = dma.done [#allocation3], 512
    $region33: #{tpu_custom_call.1} parent=1 // pred_fallthru
      _
    %v42 = vld [vmem:[#allocation2] sm:$0xff]
    %v43 = vld [vmem:[#allocation2 + $0x8] sm:$0xff]
    %v44 = vld [vmem:[#allocation2 + $0x10] sm:$0xff]
    %v45 = vld [vmem:[#allocation2 + $0x18] sm:$0xff]
    %v46 = vld [vmem:[%s1] sm:$0xff]
    %v47 = vld [vmem:[%s1 + $0x8] sm:$0xff]
    %v48 = vld [vmem:[%s1 + $0x10] sm:$0xff]
    %v49 = vld [vmem:[%s1 + $0x18] sm:$0xff]
    %v50 = vld [vmem:[%s1 + $0x20] sm:$0xff]
    %v51 = vld [vmem:[%s1 + $0x28] sm:$0xff]
    %v52 = vld [vmem:[%s1 + $0x30] sm:$0xff]
    %v53 = vld [vmem:[%s1 + $0x38] sm:$0xff]
    %v54 = vld [vmem:[%s1 + $0x40] sm:$0xff]
    %v55 = vld [vmem:[%s1 + $0x48] sm:$0xff]
    %v56 = vld [vmem:[%s1 + $0x50] sm:$0xff]
    %v57 = vld [vmem:[%s1 + $0x58] sm:$0xff]
    %v58 = vld [vmem:[%s1 + $0x60] sm:$0xff]
    %v59 = vld [vmem:[%s1 + $0x68] sm:$0xff]
    %v60 = vld [vmem:[%s1 + $0x70] sm:$0xff]
    %v61 = vld [vmem:[%s1 + $0x78] sm:$0xff]
    %v62 = vld [vmem:[%s1 + $0x80] sm:$0xff]
    %v63 = vld [vmem:[%s1 + $0x88] sm:$0xff]
    %v64 = vld [vmem:[%s1 + $0x90] sm:$0xff]
    %v65 = vld [vmem:[%s1 + $0x98] sm:$0xff]
    %v66 = vld [vmem:[%s1 + $0xa0] sm:$0xff]
    %v67 = vld [vmem:[%s1 + $0xa8] sm:$0xff]
    %v68 = vld [vmem:[%s1 + $0xb0] sm:$0xff]
    %v69 = vld [vmem:[%s1 + $0xb8] sm:$0xff]
    %v70 = vld [vmem:[%s2] sm:$0x1]
    %v72 = vperm.slane %v70, 0
    %vm74 = vcmask 523264
    %v76 = vsel %vm74, %v43, 0
    %v79 = vsel %vm74, %v45, 0
    %81 = vmatpush.msra.mxu0 %v61
    %82 = vmatpush.msra.mxu0 %v60
    %83 = vmatpush.msra.mxu0 %v59
    %84 = vmatpush.msra.mxu0 %v58
    %85 = vmatpush.msra.mxu0 %v57
    %86 = vmatpush.msra.mxu0 %v56
    %87 = vmatpush.msra.mxu0 %v55
    %88 = vmatpush.msra.mxu0 %v54
    %89 = vmatpush.msra.mxu0 %v53
    %90 = vmatpush.msra.mxu0 %v52
    %91 = vmatpush.msra.mxu0 %v51
    %92 = vmatpush.msra.mxu0 %v50
    %93 = vmatpush.msra.mxu0 %v49
    %94 = vmatpush.msra.mxu0 %v48
    %95 = vmatpush.msra.mxu0 %v47
    %96 = vmatpush.msra.mxu0 %v46
    %97 = vmatmul.f32.gmra.mxu0 %v42
    %v98 = vpop.f32.mrf.mxu0
    %v99 = vadd.f32 %v72, %v98
    %100 = vmatmul.f32.gmra.mxu0 %v44
    %v101 = vpop.f32.mrf.mxu0
    %v102 = vadd.f32 %v72, %v101
    %103 = vdwg.mxu0
    %104 = vmatpush.msra.mxu0 0.0
    %105 = vmatpush.msra.mxu0 0.0
    %106 = vmatpush.msra.mxu0 0.0
    %107 = vmatpush.msra.mxu0 0.0
    %108 = vmatpush.msra.mxu0 0.0
    %109 = vmatpush.msra.mxu0 0.0
    %110 = vmatpush.msra.mxu0 0.0
    %111 = vmatpush.msra.mxu0 0.0
    %112 = vmatpush.msra.mxu0 %v69
    %113 = vmatpush.msra.mxu0 %v68
    %114 = vmatpush.msra.mxu0 %v67
    %115 = vmatpush.msra.mxu0 %v66
    %116 = vmatpush.msra.mxu0 %v65
    %117 = vmatpush.msra.mxu0 %v64
    %118 = vmatpush.msra.mxu0 %v63
    %119 = vmatpush.msra.mxu0 %v62
    %120 = vmatmul.f32.gmra.mxu0 %v76
    %v121 = vpop.f32.mrf.mxu0
    %v122 = vadd.f32 %v99, %v121
    %123 = vmatmul.f32.gmra.mxu0 %v79
    %v124 = vpop.f32.mrf.mxu0
    %v125 = vadd.f32 %v102, %v124
    %126 = vdwg.mxu0
    %v127 = vtanh.pop %v122
    %v128 = vtanh.pop %v125
    %v129 = vld [vmem:[%s3] sm:$0xff]
    %v130 = vld [vmem:[%s3 + $0x8] sm:$0xff]
    %v131 = vld [vmem:[%s3 + $0x10] sm:$0xff]
    %v132 = vld [vmem:[%s3 + $0x18] sm:$0xff]
    %v133 = vld [vmem:[%s3 + $0x20] sm:$0xff]
    %v134 = vld [vmem:[%s3 + $0x28] sm:$0xff]
    %v135 = vld [vmem:[%s3 + $0x30] sm:$0xff]
    %v136 = vld [vmem:[%s3 + $0x38] sm:$0xff]
    %v137 = vld [vmem:[%s3 + $0x40] sm:$0xff]
    %v138 = vld [vmem:[%s3 + $0x48] sm:$0xff]
    %v139 = vld [vmem:[%s3 + $0x50] sm:$0xff]
    %v140 = vld [vmem:[%s3 + $0x58] sm:$0xff]
    %v141 = vld [vmem:[%s3 + $0x60] sm:$0xff]
    %v142 = vld [vmem:[%s3 + $0x68] sm:$0xff]
    %v143 = vld [vmem:[%s3 + $0x70] sm:$0xff]
    %v144 = vld [vmem:[%s3 + $0x78] sm:$0xff]
    %v145 = vld [vmem:[%s4] sm:$0x1]
    %v147 = vperm.slane %v145, 0
    %149 = vmatpush.msra.mxu0 %v144
    %150 = vmatpush.msra.mxu0 %v143
    %151 = vmatpush.msra.mxu0 %v142
    %152 = vmatpush.msra.mxu0 %v141
    %153 = vmatpush.msra.mxu0 %v140
    %154 = vmatpush.msra.mxu0 %v139
    %155 = vmatpush.msra.mxu0 %v138
    %156 = vmatpush.msra.mxu0 %v137
    %157 = vmatpush.msra.mxu0 %v136
    %158 = vmatpush.msra.mxu0 %v135
    %159 = vmatpush.msra.mxu0 %v134
    %160 = vmatpush.msra.mxu0 %v133
    %161 = vmatpush.msra.mxu0 %v132
    %162 = vmatpush.msra.mxu0 %v131
    %163 = vmatpush.msra.mxu0 %v130
    %164 = vmatpush.msra.mxu0 %v129
    %165 = vmatmul.f32.gmra.mxu0 %v127
    %v166 = vpop.f32.mrf.mxu0
    %v167 = vadd.f32 %v147, %v166
    %168 = vmatmul.f32.gmra.mxu0 %v128
    %v169 = vpop.f32.mrf.mxu0
    %v170 = vadd.f32 %v147, %v169
    %171 = vdwg.mxu0
    %v172 = vtanh.pop %v167
    %v173 = vtanh.pop %v170
    %v174 = vld [vmem:[%s5] sm:$0xff]
    %v175 = vld [vmem:[%s5 + $0x8] sm:$0xff]
    %v176 = vld [vmem:[%s5 + $0x10] sm:$0xff]
    %v177 = vld [vmem:[%s5 + $0x18] sm:$0xff]
    %v178 = vld [vmem:[%s5 + $0x20] sm:$0xff]
    %v179 = vld [vmem:[%s5 + $0x28] sm:$0xff]
    %v180 = vld [vmem:[%s5 + $0x30] sm:$0xff]
    %v181 = vld [vmem:[%s5 + $0x38] sm:$0xff]
    %v182 = vld [vmem:[%s6] sm:$0x1]
    %v184 = vperm.slane %v182, 0
    %v187 = vsel %vm74, %v172, 0
    %v190 = vsel %vm74, %v173, 0
    %192 = vmatpush.msra.mxu0 0.0
    %193 = vmatpush.msra.mxu0 0.0
    %194 = vmatpush.msra.mxu0 0.0
    %195 = vmatpush.msra.mxu0 0.0
    %196 = vmatpush.msra.mxu0 0.0
    %197 = vmatpush.msra.mxu0 0.0
    %198 = vmatpush.msra.mxu0 0.0
    %199 = vmatpush.msra.mxu0 0.0
    %200 = vmatpush.msra.mxu0 %v181
    %201 = vmatpush.msra.mxu0 %v180
    %202 = vmatpush.msra.mxu0 %v179
    %203 = vmatpush.msra.mxu0 %v178
    %204 = vmatpush.msra.mxu0 %v177
    %205 = vmatpush.msra.mxu0 %v176
    %206 = vmatpush.msra.mxu0 %v175
    %207 = vmatpush.msra.mxu0 %v174
    %208 = vmatmul.f32.gmra.mxu0 %v187
    %v209 = vpop.f32.mrf.mxu0
    %v210 = vadd.f32 %v184, %v209
    %211 = vmatmul.f32.gmra.mxu0 %v190
    %v212 = vpop.f32.mrf.mxu0
    %v213 = vadd.f32 %v184, %v212
    %214 = vdwg.mxu0
    %v215 = vxor.u32 %v210, 2147483648
    %v216 = vxor.u32 %v213, 2147483648
    %v217 = vmul.f32 %v215, 1.442695
    %v218 = vpow.pop %v217
    %v219 = vmul.f32 %v216, 1.442695
    %v220 = vpow.pop %v219
    %v221 = vadd.f32 %v218, 1.0
    %v222 = vadd.f32 %v220, 1.0
    %v223 = vrcp.pop %v221
    %v224 = vmul.f32 %v221, %v223
    %v225 = vsub.f32 1.0, %v224
    %v226 = vmul.f32 %v223, %v225
    %v227 = vadd.f32 %v223, %v226
    %vm228 = vweird.f32 %v221
    %vm229 = vweird.f32 %v223
    %vm230 = vmor %vm228, %vm229
    %v231 = vsel %vm230, %v223, %v227
    %v232 = vand.u32 2147483647, %v221
    %vm233 = vcmp.eq.f32.partialorder %v232, 8.507059e+37
    %v234 = vand.u32 %v221, 2147483648
    %v235 = vor.u32 1.1754944e-38, %v234
    %v236 = vsel %vm233, %v235, %v231
    %v237 = vmul.f32 1.0, %v236
    %v238 = vrcp.pop %v222
    %v239 = vmul.f32 %v222, %v238
    %v240 = vsub.f32 1.0, %v239
    %v241 = vmul.f32 %v238, %v240
    %v242 = vadd.f32 %v238, %v241
    %vm243 = vweird.f32 %v222
    %vm244 = vweird.f32 %v238
    %vm245 = vmor %vm243, %vm244
    %v246 = vsel %vm245, %v238, %v242
    %v247 = vand.u32 2147483647, %v222
    %vm248 = vcmp.eq.f32.partialorder %v247, 8.507059e+37
    %v249 = vand.u32 %v222, 2147483648
    %v250 = vor.u32 1.1754944e-38, %v249
    %v251 = vsel %vm248, %v250, %v246
    %v252 = vmul.f32 1.0, %v251
    %vm253 = vcmask 31744
    %254 = vst.msk [vmem:[%s7] sm:$0xff] %vm253, %v237
    %255 = vst.msk [vmem:[%s7 + $0x8] sm:$0xff] %vm253, %v252
    // Predicated region
    $region34: #{tpu_custom_call.1} parent=1 // pred_check
      _
    $region35: #{tpu_custom_call.1} parent=1 // pred_check_branch
      %257 = sbr.rel (0) target = $region37
    $region36: #{tpu_custom_call.1} parent=1 // pred_region
      _
    $region37: #{tpu_custom_call.1} parent=1 // pred_fallthru
      _
    // Predicated region
    $region38: #{tpu_custom_call.1} parent=1 // pred_check
      _
    $region39: #{tpu_custom_call.1} parent=1 // pred_check_branch
      %259 = sbr.rel (0) target = $region41
    $region40: #{tpu_custom_call.1} parent=1 // pred_region
      _
    $region41: #{tpu_custom_call.1} parent=1 // pred_fallthru
      _
    %260 = vsyncpa [#allocation3], 1

</llo_original>
